<compile_context>
chip_gen: v7x
topology: tpu7x:2x2x1
jax: 0.10.0
libtpu: 0.0.40
codegen_flags: <defaults>
</compile_context>

<pallas_src>
import jax
import jax.numpy as jnp
from jax import lax
from jax.experimental import pallas as pl
from jax.experimental.pallas import tpu as pltpu

EPS = 1e-5
HIDDEN = 64        # logical hidden size of the PyTorch module
HIDDEN_PAD = 128   # padded to a full 128-lane tile


def _round_up(n, m):
    return ((n + m - 1) // m) * m


def _mlp_kernel(x_ref, w1_ref, b1_ref, w2_ref, b2_ref, wo_ref, bo_ref, out_ref):
    # layer_1 + ReLU   (BatchNorm1 folded into w2/b2 outside the kernel)
    h = jnp.dot(x_ref[...], w1_ref[...], preferred_element_type=jnp.float32) + b1_ref[...]
    h = jnp.maximum(h, 0.0)                                            # (TB, 128) f32

    # layer_2 + ReLU   (BatchNorm2 folded into wo/bo outside the kernel)
    h = jnp.dot(h, w2_ref[...], preferred_element_type=jnp.float32) + b2_ref[...]
    h = jnp.maximum(h, 0.0)                                            # (TB, 128) f32

    # dropout (eval) == identity

    # layer_out + sigmoid: contract on the last dims (no explicit transpose),
    # emitted as a lane-dense (1, TB) row. bo is an SMEM scalar.
    logits = lax.dot_general(
        wo_ref[...], h,
        dimension_numbers=(((1,), (1,)), ((), ())),
        preferred_element_type=jnp.float32) + bo_ref[0, 0]             # (1, TB)
    out_ref[...] = 1.0 / (1.0 + jnp.exp(-logits))


def fold_and_pad_params(raw):
    """Fold eval-mode BatchNorm into the following Linear layers; pad hidden 64 -> 128."""
    h = raw["w1"].shape[1]
    pad = HIDDEN_PAD - h

    s1 = raw["g1"] * lax.rsqrt(raw["v1"] + EPS)        # (1, h)
    c1 = raw["be1"] - raw["m1"] * s1
    s2 = raw["g2"] * lax.rsqrt(raw["v2"] + EPS)
    c2 = raw["be2"] - raw["m2"] * s2

    w2f = s1.reshape(h, 1) * raw["w2"]                 # scale layer_2 input rows
    b2f = raw["b2"] + c1 @ raw["w2"]                   # (1, h)
    wof = s2.reshape(h, 1) * raw["wo"]                 # (h, 1)
    bof = raw["bo"] + c2 @ raw["wo"]                   # (1, 1)

    return {
        "w1": jnp.pad(raw["w1"], ((0, 0), (0, pad))),  # (nb_nodes, 128)
        "b1": jnp.pad(raw["b1"], ((0, 0), (0, pad))),  # (1, 128)
        "w2": jnp.pad(w2f, ((0, pad), (0, pad))),      # (128, 128)
        "b2": jnp.pad(b2f, ((0, 0), (0, pad))),        # (1, 128)
        "wo": jnp.pad(wof.T, ((0, 0), (0, pad))),      # (1, 128)  row layout
        "bo": bof,                                     # (1, 1)
    }


def _choose_tile_b(B, max_block_b):
    """Batch tile: small batches -> one full-array tile; larger batches -> >=2
    lane-aligned (multiple-of-128) tiles so v7x's two TensorCores both get work
    while tiles stay big enough to amortize the ~0.35us per-step overhead."""
    max_tb = max(128, (max_block_b // 128) * 128)
    if B <= 256:
        return _round_up(B, 8)
    return min(max_tb, _round_up((B + 1) // 2, 128))


def binary_classification_forward(x, folded, *, max_block_b=2048,
                                  compute_dtype=jnp.bfloat16):
    """x: (B, nb_nodes) f32; folded: output of fold_and_pad_params. Returns (B, 1) f32.

    compute_dtype controls the streamed x / w1 precision (bf16 halves the dominant
    HBM stream; f32 gives exact parity with the reference). Accumulation is always f32.
    """
    B, nb = x.shape
    H = folded["w1"].shape[1]

    TB = _choose_tile_b(B, max_block_b)
    B_pad = _round_up(B, TB)
    if B_pad != B:
        x = jnp.pad(x, ((0, B_pad - B), (0, 0)))
    n_tiles = B_pad // TB

    x_in = x.astype(compute_dtype)
    w1_in = folded["w1"].astype(compute_dtype)

    grid_spec = pltpu.PrefetchScalarGridSpec(
        num_scalar_prefetch=0,
        grid=(n_tiles,),
        in_specs=[
            pl.BlockSpec((TB, nb), lambda i: (i, 0)),      # x: streamed batch tiles
            pl.BlockSpec((nb, H), lambda i: (0, 0)),       # weights: grid-invariant (resident)
            pl.BlockSpec((1, H), lambda i: (0, 0)),
            pl.BlockSpec((H, H), lambda i: (0, 0)),
            pl.BlockSpec((1, H), lambda i: (0, 0)),
            pl.BlockSpec((1, H), lambda i: (0, 0)),
            pl.BlockSpec(memory_space=pltpu.MemorySpace.SMEM),  # bo: SMEM scalar
        ],
        out_specs=pl.BlockSpec((1, TB), lambda i: (0, i)),      # lane-dense logit row
    )

    itemsize_x = jnp.dtype(compute_dtype).itemsize
    flops = 2 * B_pad * (nb * H + H * H + H)
    bytes_accessed = (itemsize_x * (B_pad * nb + nb * H)
                      + 4 * (H * H + 3 * H + 1 + B_pad))

    out_row = pl.pallas_call(
        _mlp_kernel,
        out_shape=jax.ShapeDtypeStruct((1, B_pad), jnp.float32),
        grid_spec=grid_spec,
        compiler_params=pltpu.CompilerParams(
            dimension_semantics=("parallel",),
            # Only needed if tiles are pushed past the v5e 16 MiB scoped default.
            vmem_limit_bytes=(48 << 20) if TB > 2048 else None,
        ),
        cost_estimate=pl.CostEstimate(
            flops=flops, transcendentals=B_pad, bytes_accessed=bytes_accessed),
    )(x_in, w1_in, folded["b1"], folded["w2"], folded["b2"],
      folded["wo"], folded["bo"])

    return out_row[0, :B].reshape(B, 1)


def init_params(key, nb_nodes, hidden=HIDDEN):
    """PyTorch-layout-equivalent params; Linear weights stored as (in, out)."""
    ks = jax.random.split(key, 14)

    def lin(kw, kb, fan_in, fan_out):
        bound = 1.0 / jnp.sqrt(jnp.float32(fan_in))
        w = jax.random.uniform(kw, (fan_in, fan_out), jnp.float32, -bound, bound)
        b = jax.random.uniform(kb, (1, fan_out), jnp.float32, -bound, bound)
        return w, b

    w1, b1 = lin(ks[0], ks[1], nb_nodes, hidden)
    w2, b2 = lin(ks[2], ks[3], hidden, hidden)
    wo, bo = lin(ks[4], ks[5], hidden, 1)

    def bn(kg, kb, km, kv):
        g = 1.0 + 0.1 * jax.random.normal(kg, (1, hidden), jnp.float32)
        be = 0.1 * jax.random.normal(kb, (1, hidden), jnp.float32)
        m = 0.1 * jax.random.normal(km, (1, hidden), jnp.float32)
        v = 0.5 + jax.random.uniform(kv, (1, hidden), jnp.float32)
        return g, be, m, v

    g1, be1, m1, v1 = bn(ks[6], ks[7], ks[8], ks[9])
    g2, be2, m2, v2 = bn(ks[10], ks[11], ks[12], ks[13])

    return {
        "w1": w1, "b1": b1, "g1": g1, "be1": be1, "m1": m1, "v1": v1,
        "w2": w2, "b2": b2, "g2": g2, "be2": be2, "m2": m2, "v2": v2,
        "wo": wo, "bo": bo,
    }


def _reference_forward(x, p):
    """Pure-JAX replica of the PyTorch module in eval() mode."""
    h = jnp.maximum(x @ p["w1"] + p["b1"], 0.0)
    h = (h - p["m1"]) / jnp.sqrt(p["v1"] + EPS) * p["g1"] + p["be1"]
    h = jnp.maximum(h @ p["w2"] + p["b2"], 0.0)
    h = (h - p["m2"]) / jnp.sqrt(p["v2"] + EPS) * p["g2"] + p["be2"]
    return jax.nn.sigmoid(h @ p["wo"] + p["bo"])


if __name__ == "__main__":
    key = jax.random.PRNGKey(0)
    k_x, k_x2, k_p = jax.random.split(key, 3)

    NB_NODES = 32
    raw = init_params(k_p, NB_NODES)
    folded = fold_and_pad_params(raw)

    # Exact f32 path, single small tile: tight parity with the PyTorch-equivalent reference.
    x_small = jax.random.normal(k_x, (8, NB_NODES), jnp.float32)
    out_small = jax.block_until_ready(
        binary_classification_forward(x_small, folded, compute_dtype=jnp.float32))
    ref_small = _reference_forward(x_small, raw)
    assert out_small.shape == (8, 1)
    assert jnp.allclose(out_small, ref_small, atol=2e-5, rtol=2e-5)

    # bf16-streamed path, multi-tile grid (2 lane-aligned tiles) + batch padding/slice.
    x_big = jax.random.normal(k_x2, (1000, NB_NODES), jnp.float32)
    out_big = jax.block_until_ready(binary_classification_forward(x_big, folded))
    ref_big = _reference_forward(x_big, raw)
    assert out_big.shape == (1000, 1)
    # Tolerance loosened only for bf16 input/weight quantization; accumulation stays f32.
    assert jnp.allclose(out_big, ref_big, atol=2e-2, rtol=2e-2)

    print("KERNEL_OK")
</pallas_src>

<mosaic_0001>
module attributes {stable_mosaic.version = 11 : i64} {
  func.func @_mlp_kernel(%arg0: i32, %arg1: memref<8x32xf32, #tpu.memory_space<vmem>>, %arg2: memref<32x128xf32, #tpu.memory_space<vmem>>, %arg3: memref<1x128xf32, #tpu.memory_space<vmem>>, %arg4: memref<128x128xf32, #tpu.memory_space<vmem>>, %arg5: memref<1x128xf32, #tpu.memory_space<vmem>>, %arg6: memref<1x128xf32, #tpu.memory_space<vmem>>, %arg7: memref<1x1xf32, #tpu.memory_space<smem>>, %arg8: memref<1x8xf32, #tpu.memory_space<vmem>>) attributes {dimension_semantics = [#tpu.dimension_semantics<parallel>], iteration_bounds = array<i64: 1>, scalar_prefetch = 0 : i64, scratch_operands = 0 : i64, tpu.core_type = #tpu.core_type<tc>, window_params = [{transform_indices = @transform_0, window_bounds = array<i64: 8, 32>}, {pipeline_mode = #tpu.pipeline_mode<synchronous>, transform_indices = @transform_1, window_bounds = array<i64: 32, 128>}, {pipeline_mode = #tpu.pipeline_mode<synchronous>, transform_indices = @transform_2, window_bounds = array<i64: 1, 128>}, {pipeline_mode = #tpu.pipeline_mode<synchronous>, transform_indices = @transform_3, window_bounds = array<i64: 128, 128>}, {pipeline_mode = #tpu.pipeline_mode<synchronous>, transform_indices = @transform_4, window_bounds = array<i64: 1, 128>}, {pipeline_mode = #tpu.pipeline_mode<synchronous>, transform_indices = @transform_5, window_bounds = array<i64: 1, 128>}, {transform_indices = @transform_6, window_bounds = array<i64: 1, 1>}, {transform_indices = @transform_7, window_bounds = array<i64: 1, 8>}]} {
    %c0 = arith.constant 0 : index
    %c0_0 = arith.constant 0 : index
    %0 = vector.load %arg1[%c0, %c0_0] : memref<8x32xf32, #tpu.memory_space<vmem>>, vector<8x32xf32>
    %c0_1 = arith.constant 0 : index
    %c0_2 = arith.constant 0 : index
    %1 = vector.load %arg2[%c0_1, %c0_2] : memref<32x128xf32, #tpu.memory_space<vmem>>, vector<32x128xf32>
    %cst = arith.constant dense<0.000000e+00> : vector<8x128xf32>
    %2 = tpu.matmul %0, %1, %cst {dimension_numbers = #tpu.dot_dimension_numbers<[1], [0], [0], [1], [0, 0, 1, 1], [], []>} : vector<8x32xf32>, vector<32x128xf32>, vector<8x128xf32> -> vector<8x128xf32>
    %c0_3 = arith.constant 0 : index
    %c0_4 = arith.constant 0 : index
    %3 = vector.load %arg3[%c0_3, %c0_4] : memref<1x128xf32, #tpu.memory_space<vmem>>, vector<1x128xf32>
    %4 = vector.broadcast %3 : vector<1x128xf32> to vector<8x128xf32>
    %5 = arith.addf %2, %4 : vector<8x128xf32>
    %cst_5 = arith.constant 0.000000e+00 : f32
    %6 = vector.broadcast %cst_5 : f32 to vector<8x128xf32>
    %7 = arith.maximumf %5, %6 : vector<8x128xf32>
    %c0_6 = arith.constant 0 : index
    %c0_7 = arith.constant 0 : index
    %8 = vector.load %arg4[%c0_6, %c0_7] : memref<128x128xf32, #tpu.memory_space<vmem>>, vector<128x128xf32>
    %cst_8 = arith.constant dense<0.000000e+00> : vector<8x128xf32>
    %9 = tpu.matmul %7, %8, %cst_8 {dimension_numbers = #tpu.dot_dimension_numbers<[1], [0], [0], [1], [0, 0, 1, 1], [], []>} : vector<8x128xf32>, vector<128x128xf32>, vector<8x128xf32> -> vector<8x128xf32>
    %c0_9 = arith.constant 0 : index
    %c0_10 = arith.constant 0 : index
    %10 = vector.load %arg5[%c0_9, %c0_10] : memref<1x128xf32, #tpu.memory_space<vmem>>, vector<1x128xf32>
    %11 = vector.broadcast %10 : vector<1x128xf32> to vector<8x128xf32>
    %12 = arith.addf %9, %11 : vector<8x128xf32>
    %cst_11 = arith.constant 0.000000e+00 : f32
    %13 = vector.broadcast %cst_11 : f32 to vector<8x128xf32>
    %14 = arith.maximumf %12, %13 : vector<8x128xf32>
    %c0_12 = arith.constant 0 : index
    %c0_13 = arith.constant 0 : index
    %15 = vector.load %arg6[%c0_12, %c0_13] : memref<1x128xf32, #tpu.memory_space<vmem>>, vector<1x128xf32>
    %cst_14 = arith.constant dense<0.000000e+00> : vector<1x8xf32>
    %16 = tpu.matmul %15, %14, %cst_14 {dimension_numbers = #tpu.dot_dimension_numbers<[1], [1], [0], [0], [0, 0, 1, 0], [], []>} : vector<1x128xf32>, vector<8x128xf32>, vector<1x8xf32> -> vector<1x8xf32>
    %c0_15 = arith.constant 0 : index
    %c0_16 = arith.constant 0 : index
    %17 = memref.load %arg7[%c0_15, %c0_16] : memref<1x1xf32, #tpu.memory_space<smem>>
    %18 = vector.broadcast %17 : f32 to vector<1x8xf32>
    %19 = arith.addf %16, %18 : vector<1x8xf32>
    %cst_17 = arith.constant 0.000000e+00 : f32
    %20 = vector.broadcast %cst_17 : f32 to vector<1x8xf32>
    %21 = arith.subf %20, %19 : vector<1x8xf32>
    %22 = math.exp %21 : vector<1x8xf32>
    %cst_18 = arith.constant 1.000000e+00 : f32
    %23 = vector.broadcast %cst_18 : f32 to vector<1x8xf32>
    %24 = arith.addf %23, %22 : vector<1x8xf32>
    %cst_19 = arith.constant 1.000000e+00 : f32
    %25 = vector.broadcast %cst_19 : f32 to vector<1x8xf32>
    %26 = arith.divf %25, %24 : vector<1x8xf32>
    %c0_20 = arith.constant 0 : index
    %c0_21 = arith.constant 0 : index
    %27 = vector.load %arg8[%c0_20, %c0_21] : memref<1x8xf32, #tpu.memory_space<vmem>>, vector<1x8xf32>
    tpu.vector_store %arg8[%c0_20, %c0_21], %26 {strides = array<i32>} : memref<1x8xf32, #tpu.memory_space<vmem>>, vector<1x8xf32>,
    return
  }
  func.func @transform_0(%arg0: i32) -> (i32, i32) {
    %c0_i32 = arith.constant 0 : i32
    %c0_i32_0 = arith.constant 0 : i32
    return %arg0, %c0_i32 : i32, i32
  }
  func.func @transform_1(%arg0: i32) -> (i32, i32) {
    %c0_i32 = arith.constant 0 : i32
    %c0_i32_0 = arith.constant 0 : i32
    %c0_i32_1 = arith.constant 0 : i32
    return %c0_i32, %c0_i32_0 : i32, i32
  }
  func.func @transform_2(%arg0: i32) -> (i32, i32) {
    %c0_i32 = arith.constant 0 : i32
    %c0_i32_0 = arith.constant 0 : i32
    %c0_i32_1 = arith.constant 0 : i32
    return %c0_i32, %c0_i32_0 : i32, i32
  }
  func.func @transform_3(%arg0: i32) -> (i32, i32) {
    %c0_i32 = arith.constant 0 : i32
    %c0_i32_0 = arith.constant 0 : i32
    %c0_i32_1 = arith.constant 0 : i32
    return %c0_i32, %c0_i32_0 : i32, i32
  }
  func.func @transform_4(%arg0: i32) -> (i32, i32) {
    %c0_i32 = arith.constant 0 : i32
    %c0_i32_0 = arith.constant 0 : i32
    %c0_i32_1 = arith.constant 0 : i32
    return %c0_i32, %c0_i32_0 : i32, i32
  }
  func.func @transform_5(%arg0: i32) -> (i32, i32) {
    %c0_i32 = arith.constant 0 : i32
    %c0_i32_0 = arith.constant 0 : i32
    %c0_i32_1 = arith.constant 0 : i32
    return %c0_i32, %c0_i32_0 : i32, i32
  }
  func.func @transform_6(%arg0: i32) -> (i32, i32) {
    %c0_i32 = arith.constant 0 : i32
    %c0_i32_0 = arith.constant 0 : i32
    %c0_i32_1 = arith.constant 0 : i32
    return %c0_i32, %c0_i32_0 : i32, i32
  }
  func.func @transform_7(%arg0: i32) -> (i32, i32) {
    %c0_i32 = arith.constant 0 : i32
    %c0_i32_0 = arith.constant 0 : i32
    return %c0_i32, %arg0 : i32, i32
  }
}

</mosaic_0001>

<llo_original>
// kernel: tpu_custom_call.1
$region0: #{tpu_custom_call.1}
  #allocation0 [shape = 'u32[]', space=smem, size = 0x4, offset = 0x4, fixed_abs, tag = 'smem constant byte address 0x4 - core index']
  #allocation1 [shape = 'u32[144,128]{1,0:T(1,128)}', space=vmem, size = 0x12000, scoped, tag = 'internal scratch']
  #allocation2 [shape = 'f32[1,1]{1,0:T(1,128)S(6)}', space=smem, size = 0x200, scoped, tag = 'scoped memory for tpu_custom_call.1']
  %s0 = inlined_call_operand.hbm [shape: f32[8,32], index: 0, kind: input, shape index: {}]
  %s1 = inlined_call_operand.hbm [shape: f32[32,128], index: 1, kind: input, shape index: {}]
  %s2 = inlined_call_operand.vmem [shape: f32[1,128], index: 2, kind: input, shape index: {}]
  %s3 = inlined_call_operand.hbm [shape: f32[128,128], index: 3, kind: input, shape index: {}]
  %s4 = inlined_call_operand.vmem [shape: f32[1,128], index: 4, kind: input, shape index: {}]
  %s5 = inlined_call_operand.vmem [shape: f32[1,128], index: 5, kind: input, shape index: {}]
  %s6 = inlined_call_operand.<no memory space> [shape: f32[1,1], index: 6, kind: input, shape index: {}]
  %s7 = inlined_call_operand.hbm [shape: f32[1,8], index: 7, kind: output, shape index: {}]
  %s8 = sld [smem:[#allocation0]]
  $region50: #{tpu_custom_call.1} parent=0
    _
  %s10 = ssub.s32 1, %s8
  %s11 = scalar_select 0, %s10, %s8
  %12 = sst [smem:[#allocation2]] %s6
  $region1: #{tpu_custom_call.1} parent=0
    #allocation3 [shape = 'u8[4096]{0}', space=vmem, size = 0x1000, scoped, tag = 'input window, operand 0, single buffered']
    #allocation4 [shape = 's32[1]{0}', space=sflag, size = 0x4, scoped, tag = 'scoped memory for tpu_custom_call.1']
    #allocation5 [shape = 's32[1]{0}', space=sflag, size = 0x4, scoped, tag = 'scoped memory for tpu_custom_call.1']
    #allocation6 [shape = 'u8[16384]{0}', space=vmem, size = 0x4000, scoped, tag = 'input window, operand 1, single buffered']
    #allocation7 [shape = 's32[1]{0}', space=sflag, size = 0x4, scoped, tag = 'scoped memory for tpu_custom_call.1']
    #allocation8 [shape = 'u8[65536]{0}', space=vmem, size = 0x10000, scoped, tag = 'input window, operand 3, single buffered']
    #allocation9 [shape = 'u8[512]{0}', space=vmem, size = 0x400, scoped, tag = 'output window, operand 0, single buffered']
    %13 = vsyncpa [#allocation4], 0
    %14 = vsyncpa [#allocation7], 0
    %15 = vsyncpa [#allocation5], 0
    // Predicated region
    $region2: #{tpu_custom_call.1} parent=1 // pred_check
      _
    $region3: #{tpu_custom_call.1} parent=1 // pred_check_branch
      %17 = sbr.rel (0) target = $region5
    $region4: #{tpu_custom_call.1} parent=1 // pred_region
      %s19 = ssub.s32 128, 128
      %20 = vsyncadd [#allocation4], %s19
      %s22 = sshll.u32 [#allocation3], 4
      %s23 = int_to_ptr.vmem [resolvable:$true] %s22
      %25 = dma.hbm_to_vmem [thread:$0]  %s0, 128, %s23, [#allocation4]
    $region5: #{tpu_custom_call.1} parent=1 // pred_fallthru
      _
    // Predicated region
    $region6: #{tpu_custom_call.1} parent=1 // pred_check
      _
    $region7: #{tpu_custom_call.1} parent=1 // pred_check_branch
      %27 = sbr.rel (0) target = $region9
    $region8: #{tpu_custom_call.1} parent=1 // pred_region
      %s29 = ssub.s32 512, 512
      %30 = vsyncadd [#allocation7], %s29
      %s31 = sshll.u32 [#allocation6], 4
      %s32 = int_to_ptr.vmem [resolvable:$true] %s31
      %37 = dma.hbm_to_vmem [thread:$0]  %s1, 512, %s32, [#allocation7], 128, 128, 8
    $region9: #{tpu_custom_call.1} parent=1 // pred_fallthru
      _
    // Predicated region
    $region10: #{tpu_custom_call.1} parent=1 // pred_check
      _
    $region11: #{tpu_custom_call.1} parent=1 // pred_check_branch
      %39 = sbr.rel (0) target = $region13
    $region12: #{tpu_custom_call.1} parent=1 // pred_region
      _
    $region13: #{tpu_custom_call.1} parent=1 // pred_fallthru
      _
    // Predicated region
    $region14: #{tpu_custom_call.1} parent=1 // pred_check
      _
    $region15: #{tpu_custom_call.1} parent=1 // pred_check_branch
      %41 = sbr.rel (0) target = $region17
    $region16: #{tpu_custom_call.1} parent=1 // pred_region
      %s43 = ssub.s32 2048, 2048
      %44 = vsyncadd [#allocation7], %s43
      %s45 = sshll.u32 [#allocation8], 4
      %s46 = int_to_ptr.vmem [resolvable:$true] %s45
      %51 = dma.hbm_to_vmem [thread:$0]  %s3, 2048, %s46, [#allocation7], 128, 128, 8
    $region17: #{tpu_custom_call.1} parent=1 // pred_fallthru
      _
    // Predicated region
    $region18: #{tpu_custom_call.1} parent=1 // pred_check
      _
    $region19: #{tpu_custom_call.1} parent=1 // pred_check_branch
      %53 = sbr.rel (0) target = $region21
    $region20: #{tpu_custom_call.1} parent=1 // pred_region
      _
    $region21: #{tpu_custom_call.1} parent=1 // pred_fallthru
      _
    // Predicated region
    $region22: #{tpu_custom_call.1} parent=1 // pred_check
      _
    $region23: #{tpu_custom_call.1} parent=1 // pred_check_branch
      %55 = sbr.rel (0) target = $region25
    $region24: #{tpu_custom_call.1} parent=1 // pred_region
      _
    $region25: #{tpu_custom_call.1} parent=1 // pred_fallthru
      _
    // Predicated region
    $region26: #{tpu_custom_call.1} parent=1 // pred_check
      _
    $region27: #{tpu_custom_call.1} parent=1 // pred_check_branch
      %57 = sbr.rel (0) target = $region29
    $region28: #{tpu_custom_call.1} parent=1 // pred_region
      _
    $region29: #{tpu_custom_call.1} parent=1 // pred_fallthru
      _
    // Predicated region
    $region30: #{tpu_custom_call.1} parent=1 // pred_check
      _
    $region31: #{tpu_custom_call.1} parent=1 // pred_check_branch
      %59 = sbr.rel (0) target = $region33
    $region32: #{tpu_custom_call.1} parent=1 // pred_region
      %60 = dma.done [#allocation4], 128
    $region33: #{tpu_custom_call.1} parent=1 // pred_fallthru
      _
    // Predicated region
    $region34: #{tpu_custom_call.1} parent=1 // pred_check
      _
    $region35: #{tpu_custom_call.1} parent=1 // pred_check_branch
      %62 = sbr.rel (0) target = $region37
    $region36: #{tpu_custom_call.1} parent=1 // pred_region
      %63 = dma.done [#allocation7], 512
    $region37: #{tpu_custom_call.1} parent=1 // pred_fallthru
      _
    // Predicated region
    $region38: #{tpu_custom_call.1} parent=1 // pred_check
      _
    $region39: #{tpu_custom_call.1} parent=1 // pred_check_branch
      %65 = sbr.rel (0) target = $region41
    $region40: #{tpu_custom_call.1} parent=1 // pred_region
      %66 = dma.done [#allocation7], 2048
    $region41: #{tpu_custom_call.1} parent=1 // pred_fallthru
      _
    %v67 = vld [vmem:[#allocation3] sm:$0xff]
    %v68 = vld [vmem:[#allocation6] sm:$0xff]
    %v69 = vld [vmem:[#allocation6 + $0x8] sm:$0xff]
    %v70 = vld [vmem:[#allocation6 + $0x10] sm:$0xff]
    %v71 = vld [vmem:[#allocation6 + $0x18] sm:$0xff]
    %v72 = vld [vmem:[%s2] sm:$0x1]
    %v74 = vlaneseq
    %v75 = vshrl.u32 %v74, 7
    %v76 = vsub.s32 0, %v75
    %v77 = vrot.slane %v72, %v76
    %vm79 = vcmask 261120
    %v81 = vsel %vm79, %v67, 0
    %83 = vmatprep.subr.mxu0 0.0
    %84 = vmatpush1.msra.mxu0 %v68
    %85 = vmatprep.subr.mxu0 0.0
    %86 = vmatpush1.msra.mxu0 %v69
    %87 = vmatprep.subr.mxu0 0.0
    %88 = vmatpush1.msra.mxu0 %v70
    %89 = vmatprep.subr.mxu0 0.0
    %90 = vmatpush1.msra.mxu0 %v71
    %91 = vmatprep.subr.mxu0 0.0
    %92 = vmatpush1.msra.mxu0 0.0
    %93 = vmatprep.subr.mxu0 0.0
    %94 = vmatpush1.msra.mxu0 0.0
    %95 = vmatprep.subr.mxu0 0.0
    %96 = vmatpush1.msra.mxu0 0.0
    %97 = vmatprep.subr.mxu0 0.0
    %98 = vmatpush1.msra.mxu0 0.0
    %99 = vmatprep.subr.mxu0 0.0
    %100 = vmatpush1.msra.mxu0 0.0
    %101 = vmatprep.subr.mxu0 0.0
    %102 = vmatpush1.msra.mxu0 0.0
    %103 = vmatprep.subr.mxu0 0.0
    %104 = vmatpush1.msra.mxu0 0.0
    %105 = vmatprep.subr.mxu0 0.0
    %106 = vmatpush1.msra.mxu0 0.0
    %107 = vmatprep.subr.mxu0 0.0
    %108 = vmatpush1.msra.mxu0 0.0
    %109 = vmatprep.subr.mxu0 0.0
    %110 = vmatpush1.msra.mxu0 0.0
    %111 = vmatprep.subr.mxu0 0.0
    %112 = vmatpush1.msra.mxu0 0.0
    %113 = vmatprep.subr.mxu0 0.0
    %114 = vmatpush1.msra.mxu0 0.0
    %115 = vmatprep.subr.mxu0 0.0
    %116 = vmatpush1.msra.mxu0 0.0
    %117 = vmatprep.subr.mxu0 0.0
    %118 = vmatpush1.msra.mxu0 0.0
    %119 = vmatprep.subr.mxu0 0.0
    %120 = vmatpush1.msra.mxu0 0.0
    %121 = vmatprep.subr.mxu0 0.0
    %122 = vmatpush1.msra.mxu0 0.0
    %123 = vmatprep.subr.mxu0 0.0
    %124 = vmatpush1.msra.mxu0 0.0
    %125 = vmatprep.subr.mxu0 0.0
    %126 = vmatpush1.msra.mxu0 0.0
    %127 = vmatprep.subr.mxu0 0.0
    %128 = vmatpush1.msra.mxu0 0.0
    %129 = vmatprep.subr.mxu0 0.0
    %130 = vmatpush1.msra.mxu0 0.0
    %131 = vmatprep.subr.mxu0 0.0
    %132 = vmatpush1.msra.mxu0 0.0
    %133 = vmatprep.subr.mxu0 0.0
    %134 = vmatpush1.msra.mxu0 0.0
    %135 = vmatprep.subr.mxu0 0.0
    %136 = vmatpush1.msra.mxu0 0.0
    %137 = vmatprep.subr.mxu0 0.0
    %138 = vmatpush1.msra.mxu0 0.0
    %139 = vmatprep.subr.mxu0 0.0
    %140 = vmatpush1.msra.mxu0 0.0
    %141 = vmatprep.subr.mxu0 0.0
    %142 = vmatpush1.msra.mxu0 0.0
    %143 = vmatprep.subr.mxu0 0.0
    %144 = vmatpush1.msra.mxu0 0.0
    %145 = vmatprep.subr.mxu0 0.0
    %146 = vmatpush1.msra.mxu0 0.0
    %147 = vmatprep.mubr.f32.mxu0 0.0
    %148 = vmatmul.mubr.f32.gmra.mrb[0].mxu0 %v81
    %v149 = vpop.f32.mrb[0].mxu0
    %v150 = vadd.f32 %v77, %v149
    %v151 = vpop.f32.mrb[0].mxu0
    %152 = vdwg.mxu0
    %v153 = vmax.f32 %v150, 0.0
    %v154 = vld [vmem:[#allocation8] sm:$0xff]
    %v155 = vld [vmem:[#allocation8 + $0x8] sm:$0xff]
    %v156 = vld [vmem:[#allocation8 + $0x10] sm:$0xff]
    %v157 = vld [vmem:[#allocation8 + $0x18] sm:$0xff]
    %v158 = vld [vmem:[#allocation8 + $0x20] sm:$0xff]
    %v159 = vld [vmem:[#allocation8 + $0x28] sm:$0xff]
    %v160 = vld [vmem:[#allocation8 + $0x30] sm:$0xff]
    %v161 = vld [vmem:[#allocation8 + $0x38] sm:$0xff]
    %v162 = vld [vmem:[#allocation8 + $0x40] sm:$0xff]
    %v163 = vld [vmem:[#allocation8 + $0x48] sm:$0xff]
    %v164 = vld [vmem:[#allocation8 + $0x50] sm:$0xff]
    %v165 = vld [vmem:[#allocation8 + $0x58] sm:$0xff]
    %v166 = vld [vmem:[#allocation8 + $0x60] sm:$0xff]
    %v167 = vld [vmem:[#allocation8 + $0x68] sm:$0xff]
    %v168 = vld [vmem:[#allocation8 + $0x70] sm:$0xff]
    %v169 = vld [vmem:[#allocation8 + $0x78] sm:$0xff]
    %v170 = vld [vmem:[%s4] sm:$0x1]
    %v172 = vlaneseq
    %v173 = vshrl.u32 %v172, 7
    %v174 = vsub.s32 0, %v173
    %v175 = vrot.slane %v170, %v174
    %177 = vmatprep.subr.mxu0 0.0
    %178 = vmatpush1.msra.mxu0 %v154
    %179 = vmatprep.subr.mxu0 0.0
    %180 = vmatpush1.msra.mxu0 %v155
    %181 = vmatprep.subr.mxu0 0.0
    %182 = vmatpush1.msra.mxu0 %v156
    %183 = vmatprep.subr.mxu0 0.0
    %184 = vmatpush1.msra.mxu0 %v157
    %185 = vmatprep.subr.mxu0 0.0
    %186 = vmatpush1.msra.mxu0 %v158
    %187 = vmatprep.subr.mxu0 0.0
    %188 = vmatpush1.msra.mxu0 %v159
    %189 = vmatprep.subr.mxu0 0.0
    %190 = vmatpush1.msra.mxu0 %v160
    %191 = vmatprep.subr.mxu0 0.0
    %192 = vmatpush1.msra.mxu0 %v161
    %193 = vmatprep.subr.mxu0 0.0
    %194 = vmatpush1.msra.mxu0 %v162
    %195 = vmatprep.subr.mxu0 0.0
    %196 = vmatpush1.msra.mxu0 %v163
    %197 = vmatprep.subr.mxu0 0.0
    %198 = vmatpush1.msra.mxu0 %v164
    %199 = vmatprep.subr.mxu0 0.0
    %200 = vmatpush1.msra.mxu0 %v165
    %201 = vmatprep.subr.mxu0 0.0
    %202 = vmatpush1.msra.mxu0 %v166
    %203 = vmatprep.subr.mxu0 0.0
    %204 = vmatpush1.msra.mxu0 %v167
    %205 = vmatprep.subr.mxu0 0.0
    %206 = vmatpush1.msra.mxu0 %v168
    %207 = vmatprep.subr.mxu0 0.0
    %208 = vmatpush1.msra.mxu0 %v169
    %209 = vmatprep.subr.mxu0 0.0
    %210 = vmatpush1.msra.mxu0 0.0
    %211 = vmatprep.subr.mxu0 0.0
    %212 = vmatpush1.msra.mxu0 0.0
    %213 = vmatprep.subr.mxu0 0.0
    %214 = vmatpush1.msra.mxu0 0.0
    %215 = vmatprep.subr.mxu0 0.0
    %216 = vmatpush1.msra.mxu0 0.0
    %217 = vmatprep.subr.mxu0 0.0
    %218 = vmatpush1.msra.mxu0 0.0
    %219 = vmatprep.subr.mxu0 0.0
    %220 = vmatpush1.msra.mxu0 0.0
    %221 = vmatprep.subr.mxu0 0.0
    %222 = vmatpush1.msra.mxu0 0.0
    %223 = vmatprep.subr.mxu0 0.0
    %224 = vmatpush1.msra.mxu0 0.0
    %225 = vmatprep.subr.mxu0 0.0
    %226 = vmatpush1.msra.mxu0 0.0
    %227 = vmatprep.subr.mxu0 0.0
    %228 = vmatpush1.msra.mxu0 0.0
    %229 = vmatprep.subr.mxu0 0.0
    %230 = vmatpush1.msra.mxu0 0.0
    %231 = vmatprep.subr.mxu0 0.0
    %232 = vmatpush1.msra.mxu0 0.0
    %233 = vmatprep.subr.mxu0 0.0
    %234 = vmatpush1.msra.mxu0 0.0
    %235 = vmatprep.subr.mxu0 0.0
    %236 = vmatpush1.msra.mxu0 0.0
    %237 = vmatprep.subr.mxu0 0.0
    %238 = vmatpush1.msra.mxu0 0.0
    %239 = vmatprep.subr.mxu0 0.0
    %240 = vmatpush1.msra.mxu0 0.0
    %241 = vmatprep.mubr.f32.mxu0 0.0
    %242 = vmatmul.mubr.f32.gmra.mrb[0].mxu0 %v153
    %v243 = vpop.f32.mrb[0].mxu0
    %v244 = vadd.f32 %v175, %v243
    %v245 = vpop.f32.mrb[0].mxu0
    %246 = vdwg.mxu0
    %v247 = vmax.f32 %v244, 0.0
    %v248 = vld [vmem:[%s5] sm:$0x1]
    %s249 = sld [smem:[#allocation2]]
    %v250 = vstv %s249
    %251 = vmatprep.subr.mxu0 0.0
    %252 = vmatpush1.xpose.msra.mxu0 %v247
    %253 = vmatprep.subr.mxu0 0.0
    %254 = vmatpush1.xpose.msra.mxu0 0.0
    %255 = vmatprep.subr.mxu0 0.0
    %256 = vmatpush1.xpose.msra.mxu0 0.0
    %257 = vmatprep.subr.mxu0 0.0
    %258 = vmatpush1.xpose.msra.mxu0 0.0
    %259 = vmatprep.subr.mxu0 0.0
    %260 = vmatpush1.xpose.msra.mxu0 0.0
    %261 = vmatprep.subr.mxu0 0.0
    %262 = vmatpush1.xpose.msra.mxu0 0.0
    %263 = vmatprep.subr.mxu0 0.0
    %264 = vmatpush1.xpose.msra.mxu0 0.0
    %265 = vmatprep.subr.mxu0 0.0
    %266 = vmatpush1.xpose.msra.mxu0 0.0
    %267 = vmatprep.subr.mxu0 0.0
    %268 = vmatpush1.xpose.msra.mxu0 0.0
    %269 = vmatprep.subr.mxu0 0.0
    %270 = vmatpush1.xpose.msra.mxu0 0.0
    %271 = vmatprep.subr.mxu0 0.0
    %272 = vmatpush1.xpose.msra.mxu0 0.0
    %273 = vmatprep.subr.mxu0 0.0
    %274 = vmatpush1.xpose.msra.mxu0 0.0
    %275 = vmatprep.subr.mxu0 0.0
    %276 = vmatpush1.xpose.msra.mxu0 0.0
    %277 = vmatprep.subr.mxu0 0.0
    %278 = vmatpush1.xpose.msra.mxu0 0.0
    %279 = vmatprep.subr.mxu0 0.0
    %280 = vmatpush1.xpose.msra.mxu0 0.0
    %281 = vmatprep.subr.mxu0 0.0
    %282 = vmatpush1.xpose.msra.mxu0 0.0
    %283 = vmatprep.subr.mxu0 0.0
    %284 = vmatpush1.xpose.msra.mxu0 0.0
    %285 = vmatprep.subr.mxu0 0.0
    %286 = vmatpush1.xpose.msra.mxu0 0.0
    %287 = vmatprep.subr.mxu0 0.0
    %288 = vmatpush1.xpose.msra.mxu0 0.0
    %289 = vmatprep.subr.mxu0 0.0
    %290 = vmatpush1.xpose.msra.mxu0 0.0
    %291 = vmatprep.subr.mxu0 0.0
    %292 = vmatpush1.xpose.msra.mxu0 0.0
    %293 = vmatprep.subr.mxu0 0.0
    %294 = vmatpush1.xpose.msra.mxu0 0.0
    %295 = vmatprep.subr.mxu0 0.0
    %296 = vmatpush1.xpose.msra.mxu0 0.0
    %297 = vmatprep.subr.mxu0 0.0
    %298 = vmatpush1.xpose.msra.mxu0 0.0
    %299 = vmatprep.subr.mxu0 0.0
    %300 = vmatpush1.xpose.msra.mxu0 0.0
    %301 = vmatprep.subr.mxu0 0.0
    %302 = vmatpush1.xpose.msra.mxu0 0.0
    %303 = vmatprep.subr.mxu0 0.0
    %304 = vmatpush1.xpose.msra.mxu0 0.0
    %305 = vmatprep.subr.mxu0 0.0
    %306 = vmatpush1.xpose.msra.mxu0 0.0
    %307 = vmatprep.subr.mxu0 0.0
    %308 = vmatpush1.xpose.msra.mxu0 0.0
    %309 = vmatprep.subr.mxu0 0.0
    %310 = vmatpush1.xpose.msra.mxu0 0.0
    %311 = vmatprep.subr.mxu0 0.0
    %312 = vmatpush1.xpose.msra.mxu0 0.0
    %313 = vmatprep.subr.mxu0 0.0
    %314 = vmatpush1.xpose.msra.mxu0 0.0
    %315 = vmatprep.mubr.f32.mxu0 0.0
    %316 = vmatmul.mubr.f32.gmra.mrb[0].mxu0 %v248
    %v317 = vpop.f32.mrb[0].mxu0
    %v318 = vadd.f32 %v250, %v317
    %v319 = vpop.f32.mrb[0].mxu0
    %320 = vdwg.mxu0
    %v321 = vsub.f32 0.0, %v318
    %v322 = vmul.f32 %v321, 1.442695
    %v323 = vpow.pop %v322
    %v324 = vadd.f32 %v323, 1.0
    %v325 = vrcp.pop %v324
    %v326 = vmul.f32 1.0, %v325
    %vm327 = vcmask 57344
    %328 = vst.msk [vmem:[#allocation9] sm:$0x1] %vm327, %v326
    // Predicated region
    $region42: #{tpu_custom_call.1} parent=1 // pred_check
      _
    $region43: #{tpu_custom_call.1} parent=1 // pred_check_branch
      %330 = sbr.rel (0) target = $region45
    $region44: #{tpu_custom_call.1} parent=1 // pred_region
      %s332 = ssub.s32 16, 16
      %333 = vsyncadd [#allocation5], %s332
      %s335 = sshll.u32 [#allocation9], 4
      %s336 = int_to_ptr.vmem [resolvable:$true] %s335
      %338 = dma.vmem_to_hbm [thread:$0]  %s336, 16, %s7, [#allocation5]
    $region45: #{tpu_custom_call.1} parent=1 // pred_fallthru
      _
    // Predicated region
    $region46: #{tpu_custom_call.1} parent=1 // pred_check
      _
    $region47: #{tpu_custom_call.1} parent=1 // pred_check_branch
      %340 = sbr.rel (0) target = $region49
    $region48: #{tpu_custom_call.1} parent=1 // pred_region
      %341 = dma.done [#allocation5], 16
    $region49: #{tpu_custom_call.1} parent=1 // pred_fallthru
      _
    %342 = vsyncpa [#allocation4], 1
    %343 = vsyncpa [#allocation7], 1
    %344 = vsyncpa [#allocation5], 1

</llo_original>
